<compile_context>
chip_gen: v7x
topology: tpu7x:2x2x1
jax: 0.10.0
libtpu: 0.0.40
codegen_flags: <defaults>
</compile_context>

<pallas_src>
import functools

import jax
import jax.numpy as jnp
from jax.experimental import pallas as pl
from jax.experimental.pallas import tpu as pltpu


def _proxyanchor_kernel(batch_ref, proxies_t_ref, labels_ref,
                        p_sum_ref, n_sum_ref, *, alpha, delta, tc):
    ci = pl.program_id(0)   # class-tile index ("parallel")
    bi = pl.program_id(1)   # batch-tile index (reduction, "arbitrary")

    @pl.when(bi == 0)
    def _init():
        p_sum_ref[...] = jnp.zeros_like(p_sum_ref)
        n_sum_ref[...] = jnp.zeros_like(n_sum_ref)

    # Row L2-normalize the embedding tile: rsqrt (EUP slot) + one VALU mul.
    b = batch_ref[...]                                            # (TB, D) f32
    inv = jax.lax.rsqrt(jnp.sum(b * b, axis=-1, keepdims=True) + 1e-24)
    b_norm = b * inv

    # sim = norm(batch) @ norm(P).T ; proxies pre-normalized + transposed in
    # the wrapper, so this is a clean (TB, D) x (D, TC) MXU contraction.
    sim = jnp.dot(b_norm, proxies_t_ref[...],
                  preferred_element_type=jnp.float32)             # (TB, TC)

    # One-hot membership of each row's label within this class tile.
    lab = labels_ref[...]                                         # (TB, 1) i32
    cls_ids = jax.lax.broadcasted_iota(jnp.int32, sim.shape, 1) + ci * tc
    is_pos = cls_ids == lab                                       # (TB, TC)

    # Single exp: fold cos = 1 - sim into the exponent constants.
    #   pos arg =  alpha*(cos + delta) = alpha*(1+delta) - alpha*sim
    #   neg arg = -alpha*(cos - delta) = alpha*sim - alpha*(1-delta)
    a_sim = alpha * sim
    arg = jnp.where(is_pos,
                    (alpha * (1.0 + delta)) - a_sim,
                    a_sim - (alpha * (1.0 - delta)))
    e = jnp.exp(arg)

    zero = jnp.zeros_like(e)
    p_sum_ref[...] += jnp.sum(jnp.where(is_pos, e, zero), axis=0, keepdims=True)
    n_sum_ref[...] += jnp.sum(jnp.where(is_pos, zero, e), axis=0, keepdims=True)


def _pick_tile(dim, candidates):
    """Largest candidate that evenly divides `dim`; else the full dim."""
    for t in candidates:
        if dim >= t and dim % t == 0:
            return t
    return dim


def proxyanchor_loss(batch, proxies, labels, *, n_classes,
                     alpha=32.0, delta=0.1):
    B, D = batch.shape
    C, D2 = proxies.shape
    assert D == D2 and C == n_classes

    batch = batch.astype(jnp.float32)
    proxies = proxies.astype(jnp.float32)
    labels2d = labels.reshape(B, 1).astype(jnp.int32)

    # Hoist proxy normalization out of the kernel (would otherwise be redone
    # every grid step); present it as a lane-major [D, C] MXU RHS.
    p_norm = proxies / (
        jnp.sqrt(jnp.sum(proxies * proxies, axis=-1, keepdims=True)) + 1e-12)
    p_norm_t = jnp.transpose(p_norm)                              # (D, C)

    # Tile sizes: multiples of 8 (sublane) for B, multiples of 128 (lane) for
    # C; fall back to the full dim when it does not divide (keeps pad regions
    # out of the reduction).  Sized well under the 32 MiB scoped-VMEM default
    # so the same tiling fits v5e/v6e (128 MiB) and v7x (64 MiB).
    tb = _pick_tile(B, (512, 256, 128, 64, 32, 16, 8))
    tc = _pick_tile(C, (512, 256, 128))
    grid = (C // tc, B // tb)

    kernel = functools.partial(_proxyanchor_kernel,
                               alpha=float(alpha), delta=float(delta), tc=tc)

    p_sum, n_sum = pl.pallas_call(
        kernel,
        out_shape=(jax.ShapeDtypeStruct((1, C), jnp.float32),
                   jax.ShapeDtypeStruct((1, C), jnp.float32)),
        grid=grid,
        in_specs=[
            pl.BlockSpec((tb, D), lambda ci, bi: (bi, 0)),   # batch embeddings
            pl.BlockSpec((D, tc), lambda ci, bi: (0, ci)),   # normalized P^T
            pl.BlockSpec((tb, 1), lambda ci, bi: (bi, 0)),   # labels
        ],
        out_specs=(pl.BlockSpec((1, tc), lambda ci, bi: (0, ci)),
                   pl.BlockSpec((1, tc), lambda ci, bi: (0, ci))),
        compiler_params=pltpu.CompilerParams(
            dimension_semantics=("parallel", "arbitrary")),
    )(batch, p_norm_t, labels2d)

    # O(C) finalize in the wrapper (keeps the kernel output lane-dense and the
    # class axis megacore-parallel).  p_sum[c] > 0 iff class c has a positive
    # in the batch, since every pos_exp term is strictly positive.
    p_sum = p_sum[0]
    n_sum = n_sum[0]
    num_valid = jnp.sum((p_sum > 0.0).astype(jnp.float32))
    pos_term = jnp.sum(jnp.log(1.0 + p_sum)) / num_valid
    neg_term = jnp.sum(jnp.log(1.0 + n_sum)) / float(n_classes)
    return pos_term + neg_term


def _reference_loss(batch, proxies, labels, *, n_classes, alpha=32.0, delta=0.1):
    """Pure-JAX reference mirroring the PyTorch module."""
    def norm(x):
        return x / (jnp.linalg.norm(x, axis=-1, keepdims=True) + 1e-12)
    cos = 1.0 - norm(batch) @ norm(proxies).T
    p_one_hot = jax.nn.one_hot(labels, n_classes, dtype=jnp.float32)
    n_one_hot = 1.0 - p_one_hot
    pos_exp = jnp.exp(alpha * (cos + delta))
    neg_exp = jnp.exp(-alpha * (cos - delta))
    p_sim_sum = jnp.sum(p_one_hot * pos_exp, axis=0)
    n_sim_sum = jnp.sum(n_one_hot * neg_exp, axis=0)
    num_valid = jnp.sum((p_one_hot.sum(axis=0) > 0).astype(jnp.float32))
    pos_term = jnp.sum(jnp.log(1.0 + p_sim_sum)) / num_valid
    neg_term = jnp.sum(jnp.log(1.0 + n_sim_sum)) / n_classes
    return pos_term + neg_term


if __name__ == "__main__":
    # Small shapes consistent with the module (opt.n_classes=16,
    # opt.embed_dim=32, batch of 8 embeddings).
    B, D, C = 8, 32, 16
    key = jax.random.PRNGKey(0)
    k_b, k_p, k_l = jax.random.split(key, 3)

    batch = jax.random.normal(k_b, (B, D), dtype=jnp.float32)
    # proxies ~ kaiming_normal_(mode='fan_out'): std = sqrt(2 / n_classes)
    proxies = jax.random.normal(k_p, (C, D), dtype=jnp.float32) * jnp.sqrt(2.0 / C)
    labels = jax.random.randint(k_l, (B,), 0, C, dtype=jnp.int32)

    loss = proxyanchor_loss(batch, proxies, labels, n_classes=C)
    jax.block_until_ready(loss)

    ref = _reference_loss(batch, proxies, labels, n_classes=C)
    assert jnp.allclose(loss, ref, rtol=1e-4, atol=1e-4), (loss, ref)

    print("KERNEL_OK")
</pallas_src>

<mosaic_0001>
module attributes {stable_mosaic.version = 11 : i64} {
  func.func @_proxyanchor_kernel(%arg0: i32, %arg1: i32, %arg2: memref<8x32xf32, #tpu.memory_space<vmem>>, %arg3: memref<32x16xf32, #tpu.memory_space<vmem>>, %arg4: memref<8x1xi32, #tpu.memory_space<vmem>>, %arg5: memref<1x16xf32, #tpu.memory_space<vmem>>, %arg6: memref<1x16xf32, #tpu.memory_space<vmem>>) attributes {dimension_semantics = [#tpu.dimension_semantics<parallel>, #tpu.dimension_semantics<arbitrary>], iteration_bounds = array<i64: 1, 1>, scalar_prefetch = 0 : i64, scratch_operands = 0 : i64, tpu.core_type = #tpu.core_type<tc>, window_params = [{transform_indices = @transform_0, window_bounds = array<i64: 8, 32>}, {transform_indices = @transform_1, window_bounds = array<i64: 32, 16>}, {transform_indices = @transform_2, window_bounds = array<i64: 8, 1>}, {transform_indices = @transform_3, window_bounds = array<i64: 1, 16>}, {transform_indices = @transform_4, window_bounds = array<i64: 1, 16>}]} {
    %c0_i32 = arith.constant 0 : i32
    %0 = arith.cmpi eq, %arg1, %c0_i32 : i32
    %1 = arith.extui %0 : i1 to i32
    %c0_i32_0 = arith.constant 0 : i32
    %2 = arith.cmpi ne, %1, %c0_i32_0 : i32
    scf.if %2 {
      %cst_22 = arith.constant 0.000000e+00 : f32
      %42 = vector.broadcast %cst_22 : f32 to vector<1x16xf32>
      %c0_23 = arith.constant 0 : index
      %c0_24 = arith.constant 0 : index
      %43 = vector.load %arg5[%c0_23, %c0_24] : memref<1x16xf32, #tpu.memory_space<vmem>>, vector<1x16xf32>
      tpu.vector_store %arg5[%c0_23, %c0_24], %42 {strides = array<i32>} : memref<1x16xf32, #tpu.memory_space<vmem>>, vector<1x16xf32>,
      %cst_25 = arith.constant 0.000000e+00 : f32
      %44 = vector.broadcast %cst_25 : f32 to vector<1x16xf32>
      %c0_26 = arith.constant 0 : index
      %c0_27 = arith.constant 0 : index
      %45 = vector.load %arg6[%c0_26, %c0_27] : memref<1x16xf32, #tpu.memory_space<vmem>>, vector<1x16xf32>
      tpu.vector_store %arg6[%c0_26, %c0_27], %44 {strides = array<i32>} : memref<1x16xf32, #tpu.memory_space<vmem>>, vector<1x16xf32>,
    } else {
    }
    %c0 = arith.constant 0 : index
    %c0_1 = arith.constant 0 : index
    %3 = vector.load %arg2[%c0, %c0_1] : memref<8x32xf32, #tpu.memory_space<vmem>>, vector<8x32xf32>
    %4 = arith.mulf %3, %3 : vector<8x32xf32>
    %cst = arith.constant dense<0.000000e+00> : vector<8xf32>
    %5 = vector.multi_reduction <add>, %4, %cst [1] : vector<8x32xf32> to vector<8xf32>
    %6 = vector.shape_cast %5 : vector<8xf32> to vector<8x1xf32>
    %cst_2 = arith.constant 1.000000e-24 : f32
    %7 = vector.broadcast %cst_2 : f32 to vector<8x1xf32>
    %8 = arith.addf %6, %7 : vector<8x1xf32>
    %9 = math.rsqrt %8 : vector<8x1xf32>
    %10 = vector.broadcast %9 : vector<8x1xf32> to vector<8x32xf32>
    %11 = arith.mulf %3, %10 : vector<8x32xf32>
    %c0_3 = arith.constant 0 : index
    %c0_4 = arith.constant 0 : index
    %12 = vector.load %arg3[%c0_3, %c0_4] : memref<32x16xf32, #tpu.memory_space<vmem>>, vector<32x16xf32>
    %cst_5 = arith.constant dense<0.000000e+00> : vector<8x16xf32>
    %13 = tpu.matmul %11, %12, %cst_5 {dimension_numbers = #tpu.dot_dimension_numbers<[1], [0], [0], [1], [0, 0, 1, 1], [], []>} : vector<8x32xf32>, vector<32x16xf32>, vector<8x16xf32> -> vector<8x16xf32>
    %c0_6 = arith.constant 0 : index
    %c0_7 = arith.constant 0 : index
    %14 = vector.load %arg4[%c0_6, %c0_7] : memref<8x1xi32, #tpu.memory_space<vmem>>, vector<8x1xi32>
    %15 = tpu.iota {dimensions = array<i32: 1>} : vector<8x16xi32>
    %c16_i32 = arith.constant 16 : i32
    %16 = arith.muli %arg0, %c16_i32 : i32
    %17 = vector.broadcast %16 : i32 to vector<8x16xi32>
    %18 = arith.addi %15, %17 : vector<8x16xi32>
    %19 = vector.broadcast %14 : vector<8x1xi32> to vector<8x16xi32>
    %20 = arith.cmpi eq, %18, %19 : vector<8x16xi32>
    %cst_8 = arith.constant 3.200000e+01 : f32
    %21 = vector.broadcast %cst_8 : f32 to vector<8x16xf32>
    %22 = arith.mulf %21, %13 : vector<8x16xf32>
    %cst_9 = arith.constant 3.520000e+01 : f32
    %23 = vector.broadcast %cst_9 : f32 to vector<8x16xf32>
    %24 = arith.subf %23, %22 : vector<8x16xf32>
    %cst_10 = arith.constant 2.880000e+01 : f32
    %25 = vector.broadcast %cst_10 : f32 to vector<8x16xf32>
    %26 = arith.subf %22, %25 : vector<8x16xf32>
    %27 = arith.select %20, %24, %26 : vector<8x16xi1>, vector<8x16xf32>
    %28 = math.exp %27 : vector<8x16xf32>
    %cst_11 = arith.constant 0.000000e+00 : f32
    %29 = vector.broadcast %cst_11 : f32 to vector<8x16xf32>
    %c0_12 = arith.constant 0 : index
    %c0_13 = arith.constant 0 : index
    %30 = vector.load %arg5[%c0_12, %c0_13] : memref<1x16xf32, #tpu.memory_space<vmem>>, vector<1x16xf32>
    %31 = arith.select %20, %28, %29 : vector<8x16xi1>, vector<8x16xf32>
    %cst_14 = arith.constant dense<0.000000e+00> : vector<16xf32>
    %32 = vector.multi_reduction <add>, %31, %cst_14 [0] : vector<8x16xf32> to vector<16xf32>
    %33 = vector.shape_cast %32 : vector<16xf32> to vector<1x16xf32>
    %34 = arith.addf %30, %33 : vector<1x16xf32>
    %c0_15 = arith.constant 0 : index
    %c0_16 = arith.constant 0 : index
    %35 = vector.load %arg5[%c0_15, %c0_16] : memref<1x16xf32, #tpu.memory_space<vmem>>, vector<1x16xf32>
    tpu.vector_store %arg5[%c0_15, %c0_16], %34 {strides = array<i32>} : memref<1x16xf32, #tpu.memory_space<vmem>>, vector<1x16xf32>,
    %c0_17 = arith.constant 0 : index
    %c0_18 = arith.constant 0 : index
    %36 = vector.load %arg6[%c0_17, %c0_18] : memref<1x16xf32, #tpu.memory_space<vmem>>, vector<1x16xf32>
    %37 = arith.select %20, %29, %28 : vector<8x16xi1>, vector<8x16xf32>
    %cst_19 = arith.constant dense<0.000000e+00> : vector<16xf32>
    %38 = vector.multi_reduction <add>, %37, %cst_19 [0] : vector<8x16xf32> to vector<16xf32>
    %39 = vector.shape_cast %38 : vector<16xf32> to vector<1x16xf32>
    %40 = arith.addf %36, %39 : vector<1x16xf32>
    %c0_20 = arith.constant 0 : index
    %c0_21 = arith.constant 0 : index
    %41 = vector.load %arg6[%c0_20, %c0_21] : memref<1x16xf32, #tpu.memory_space<vmem>>, vector<1x16xf32>
    tpu.vector_store %arg6[%c0_20, %c0_21], %40 {strides = array<i32>} : memref<1x16xf32, #tpu.memory_space<vmem>>, vector<1x16xf32>,
    return
  }
  func.func @transform_0(%arg0: i32, %arg1: i32) -> (i32, i32) {
    %c0_i32 = arith.constant 0 : i32
    %c0_i32_0 = arith.constant 0 : i32
    return %arg1, %c0_i32 : i32, i32
  }
  func.func @transform_1(%arg0: i32, %arg1: i32) -> (i32, i32) {
    %c0_i32 = arith.constant 0 : i32
    %c0_i32_0 = arith.constant 0 : i32
    return %c0_i32, %arg0 : i32, i32
  }
  func.func @transform_2(%arg0: i32, %arg1: i32) -> (i32, i32) {
    %c0_i32 = arith.constant 0 : i32
    %c0_i32_0 = arith.constant 0 : i32
    return %arg1, %c0_i32 : i32, i32
  }
  func.func @transform_3(%arg0: i32, %arg1: i32) -> (i32, i32) {
    %c0_i32 = arith.constant 0 : i32
    %c0_i32_0 = arith.constant 0 : i32
    return %c0_i32, %arg0 : i32, i32
  }
  func.func @transform_4(%arg0: i32, %arg1: i32) -> (i32, i32) {
    %c0_i32 = arith.constant 0 : i32
    %c0_i32_0 = arith.constant 0 : i32
    return %c0_i32, %arg0 : i32, i32
  }
}

</mosaic_0001>

<llo_original>
// kernel: tpu_custom_call.1
$region0: #{tpu_custom_call.1}
  #allocation0 [shape = 'u32[]', space=smem, size = 0x4, offset = 0x4, fixed_abs, tag = 'smem constant byte address 0x4 - core index']
  #allocation1 [shape = 'u32[144,128]{1,0:T(1,128)}', space=vmem, size = 0x12000, scoped, tag = 'internal scratch']
  %s0 = inlined_call_operand.vmem [shape: f32[8,32], index: 0, kind: input, shape index: {}]
  %s1 = inlined_call_operand.vmem [shape: f32[32,16], index: 1, kind: input, shape index: {}]
  %s2 = inlined_call_operand.vmem [shape: s32[8,1], index: 2, kind: input, shape index: {}]
  %s3 = inlined_call_operand.hbm [shape: f32[1,16], index: 3, kind: output, shape index: {0}]
  %s4 = inlined_call_operand.hbm [shape: f32[1,16], index: 4, kind: output, shape index: {1}]
  %5 = xla_tuple %s3, %s4
  %s6 = sld [smem:[#allocation0]]
  $region34: #{tpu_custom_call.1} parent=0
    _
  %s8 = ssub.s32 1, %s6
  %s9 = scalar_select 0, %s8, %s6
  $region1: #{tpu_custom_call.1} parent=0
    #allocation2 [shape = 'u8[512]{0}', space=vmem, size = 0x400, scoped, tag = 'output window, operand 0, single buffered']
    #allocation3 [shape = 's32[1]{0}', space=sflag, size = 0x4, scoped, tag = 'scoped memory for tpu_custom_call.1']
    #allocation4 [shape = 'u8[512]{0}', space=vmem, size = 0x400, scoped, tag = 'output window, operand 1, single buffered']
    #allocation5 [shape = 's32[1]{0}', space=sflag, size = 0x4, scoped, tag = 'scoped memory for tpu_custom_call.1']
    %10 = vsyncpa [#allocation3], 0
    %11 = vsyncpa [#allocation5], 0
    // Predicated region
    $region2: #{tpu_custom_call.1} parent=1 // pred_check
      _
    $region3: #{tpu_custom_call.1} parent=1 // pred_check_branch
      %13 = sbr.rel (0) target = $region5
    $region4: #{tpu_custom_call.1} parent=1 // pred_region
      _
    $region5: #{tpu_custom_call.1} parent=1 // pred_fallthru
      _
    // Predicated region
    $region6: #{tpu_custom_call.1} parent=1 // pred_check
      _
    $region7: #{tpu_custom_call.1} parent=1 // pred_check_branch
      %15 = sbr.rel (0) target = $region9
    $region8: #{tpu_custom_call.1} parent=1 // pred_region
      _
    $region9: #{tpu_custom_call.1} parent=1 // pred_fallthru
      _
    // Predicated region
    $region10: #{tpu_custom_call.1} parent=1 // pred_check
      _
    $region11: #{tpu_custom_call.1} parent=1 // pred_check_branch
      %17 = sbr.rel (0) target = $region13
    $region12: #{tpu_custom_call.1} parent=1 // pred_region
      _
    $region13: #{tpu_custom_call.1} parent=1 // pred_fallthru
      _
    %p18 = scmp.eq.s32.totalorder 0, 0
    // Predicated region
    $region14: #{tpu_custom_call.1} parent=1 // pred_check
      %p19 = pneg %p18
    $region15: #{tpu_custom_call.1} parent=1 // pred_check_branch
      %21 = sbr.rel (%p19) target = $region17
    $region16: #{tpu_custom_call.1} parent=1 // pred_region
      %vm22 = vcmask 122880
      %23 = vst.msk [vmem:[#allocation2] sm:$0x1] %vm22, 0.0
      %24 = vst.msk [vmem:[#allocation4] sm:$0x1] %vm22, 0.0
    $region17: #{tpu_custom_call.1} parent=1 // pred_fallthru
      _
    %v25 = vld [vmem:[%s0] sm:$0xff]
    %v26 = vmul.f32 %v25, %v25
    %vm27 = vcmask 261120
    %v28 = vsel %vm27, %v26, 0.0
    %29 = vadd.xlane.f32.xlu0 %v28
    %v30 = vpop.xlane.xlu0 %29
    %v31 = vadd.f32 %v30, 1e-24
    %v32 = vrsqrt.pop %v31
    %v33 = vmul.f32 %v25, %v32
    %v34 = vld [vmem:[%s1] sm:$0xff]
    %v35 = vld [vmem:[%s1 + $0x8] sm:$0xff]
    %v36 = vld [vmem:[%s1 + $0x10] sm:$0xff]
    %v37 = vld [vmem:[%s1 + $0x18] sm:$0xff]
    %v39 = vsel %vm27, %v33, 0
    %41 = vmatprep.subr.mxu0 0.0
    %42 = vmatpush1.msra.mxu0 %v34
    %43 = vmatprep.subr.mxu0 0.0
    %44 = vmatpush1.msra.mxu0 %v35
    %45 = vmatprep.subr.mxu0 0.0
    %46 = vmatpush1.msra.mxu0 %v36
    %47 = vmatprep.subr.mxu0 0.0
    %48 = vmatpush1.msra.mxu0 %v37
    %49 = vmatprep.subr.mxu0 0.0
    %50 = vmatpush1.msra.mxu0 0.0
    %51 = vmatprep.subr.mxu0 0.0
    %52 = vmatpush1.msra.mxu0 0.0
    %53 = vmatprep.subr.mxu0 0.0
    %54 = vmatpush1.msra.mxu0 0.0
    %55 = vmatprep.subr.mxu0 0.0
    %56 = vmatpush1.msra.mxu0 0.0
    %57 = vmatprep.subr.mxu0 0.0
    %58 = vmatpush1.msra.mxu0 0.0
    %59 = vmatprep.subr.mxu0 0.0
    %60 = vmatpush1.msra.mxu0 0.0
    %61 = vmatprep.subr.mxu0 0.0
    %62 = vmatpush1.msra.mxu0 0.0
    %63 = vmatprep.subr.mxu0 0.0
    %64 = vmatpush1.msra.mxu0 0.0
    %65 = vmatprep.subr.mxu0 0.0
    %66 = vmatpush1.msra.mxu0 0.0
    %67 = vmatprep.subr.mxu0 0.0
    %68 = vmatpush1.msra.mxu0 0.0
    %69 = vmatprep.subr.mxu0 0.0
    %70 = vmatpush1.msra.mxu0 0.0
    %71 = vmatprep.subr.mxu0 0.0
    %72 = vmatpush1.msra.mxu0 0.0
    %73 = vmatprep.subr.mxu0 0.0
    %74 = vmatpush1.msra.mxu0 0.0
    %75 = vmatprep.subr.mxu0 0.0
    %76 = vmatpush1.msra.mxu0 0.0
    %77 = vmatprep.subr.mxu0 0.0
    %78 = vmatpush1.msra.mxu0 0.0
    %79 = vmatprep.subr.mxu0 0.0
    %80 = vmatpush1.msra.mxu0 0.0
    %81 = vmatprep.subr.mxu0 0.0
    %82 = vmatpush1.msra.mxu0 0.0
    %83 = vmatprep.subr.mxu0 0.0
    %84 = vmatpush1.msra.mxu0 0.0
    %85 = vmatprep.subr.mxu0 0.0
    %86 = vmatpush1.msra.mxu0 0.0
    %87 = vmatprep.subr.mxu0 0.0
    %88 = vmatpush1.msra.mxu0 0.0
    %89 = vmatprep.subr.mxu0 0.0
    %90 = vmatpush1.msra.mxu0 0.0
    %91 = vmatprep.subr.mxu0 0.0
    %92 = vmatpush1.msra.mxu0 0.0
    %93 = vmatprep.subr.mxu0 0.0
    %94 = vmatpush1.msra.mxu0 0.0
    %95 = vmatprep.subr.mxu0 0.0
    %96 = vmatpush1.msra.mxu0 0.0
    %97 = vmatprep.subr.mxu0 0.0
    %98 = vmatpush1.msra.mxu0 0.0
    %99 = vmatprep.subr.mxu0 0.0
    %100 = vmatpush1.msra.mxu0 0.0
    %101 = vmatprep.subr.mxu0 0.0
    %102 = vmatpush1.msra.mxu0 0.0
    %103 = vmatprep.subr.mxu0 0.0
    %104 = vmatpush1.msra.mxu0 0.0
    %105 = vmatprep.mubr.f32.mxu0 0.0
    %106 = vmatmul.mubr.f32.gmra.mrb[0].mxu0 %v39
    %v107 = vpop.f32.mrb[0].mxu0
    %v108 = vadd.f32 0.0, %v107
    %v109 = vpop.f32.mrb[0].mxu0
    %110 = vdwg.mxu0
    %v111 = vld [vmem:[%s2] sm:$0xff]
    %v112 = vlaneseq
    %v113 = vand.u32 %v112, 127
    %s114 = smul.u32 0, 16
    %v115 = vstv %s114
    %v116 = vadd.s32 %v113, %v115
    %117 = vset.pattern.permute.xlu0 0
    %118 = vperm.xlu0 %117, %v111
    %v119 = vpop.permute.xlu0 %118
    %vm120 = vcmp.eq.s32.totalorder %v116, %v119
    %v121 = vmul.f32 %v108, 32.0
    %v122 = vsub.f32 35.2, %v121
    %v123 = vsub.f32 %v121, 28.8
    %v124 = vsel %vm120, %v122, %v123
    %v125 = vmul.f32 %v124, 1.442695
    %v126 = vpow.pop %v125
    %v127 = vld [vmem:[#allocation2] sm:$0x1]
    %v128 = vsel %vm120, %v126, 0.0
    %vm129 = vcmask 130048
    %v130 = vsel %vm129, %v128, 0.0
    %v131 = vrot.slane %v130, 4
    %v132 = vadd.f32 %v130, %v131
    %v133 = vrot.slane %v132, 2
    %v134 = vadd.f32 %v132, %v133
    %v135 = vrot.slane %v134, 1
    %v136 = vadd.f32 %v134, %v135
    %v137 = vadd.f32 %v127, %v136
    %vm138 = vcmask 122880
    %139 = vst.msk [vmem:[#allocation2] sm:$0x1] %vm138, %v137
    %v140 = vld [vmem:[#allocation4] sm:$0x1]
    %v141 = vsel %vm120, 0.0, %v126
    %v142 = vsel %vm129, %v141, 0.0
    %v143 = vrot.slane %v142, 4
    %v144 = vadd.f32 %v142, %v143
    %v145 = vrot.slane %v144, 2
    %v146 = vadd.f32 %v144, %v145
    %v147 = vrot.slane %v146, 1
    %v148 = vadd.f32 %v146, %v147
    %v149 = vadd.f32 %v140, %v148
    %150 = vst.msk [vmem:[#allocation4] sm:$0x1] %vm138, %v149
    // Predicated region
    $region18: #{tpu_custom_call.1} parent=1 // pred_check
      _
    $region19: #{tpu_custom_call.1} parent=1 // pred_check_branch
      %152 = sbr.rel (0) target = $region21
    $region20: #{tpu_custom_call.1} parent=1 // pred_region
      %s154 = ssub.s32 16, 16
      %155 = vsyncadd [#allocation3], %s154
      %s157 = sshll.u32 [#allocation2], 4
      %s158 = int_to_ptr.vmem [resolvable:$true] %s157
      %160 = dma.vmem_to_hbm [thread:$0]  %s158, 16, %s3, [#allocation3]
    $region21: #{tpu_custom_call.1} parent=1 // pred_fallthru
      _
    // Predicated region
    $region22: #{tpu_custom_call.1} parent=1 // pred_check
      _
    $region23: #{tpu_custom_call.1} parent=1 // pred_check_branch
      %162 = sbr.rel (0) target = $region25
    $region24: #{tpu_custom_call.1} parent=1 // pred_region
      %s164 = ssub.s32 16, 16
      %165 = vsyncadd [#allocation5], %s164
      %s167 = sshll.u32 [#allocation4], 4
      %s168 = int_to_ptr.vmem [resolvable:$true] %s167
      %170 = dma.vmem_to_hbm [thread:$0]  %s168, 16, %s4, [#allocation5]
    $region25: #{tpu_custom_call.1} parent=1 // pred_fallthru
      _
    // Predicated region
    $region26: #{tpu_custom_call.1} parent=1 // pred_check
      _
    $region27: #{tpu_custom_call.1} parent=1 // pred_check_branch
      %172 = sbr.rel (0) target = $region29
    $region28: #{tpu_custom_call.1} parent=1 // pred_region
      %173 = dma.done [#allocation3], 16
    $region29: #{tpu_custom_call.1} parent=1 // pred_fallthru
      _
    // Predicated region
    $region30: #{tpu_custom_call.1} parent=1 // pred_check
      _
    $region31: #{tpu_custom_call.1} parent=1 // pred_check_branch
      %175 = sbr.rel (0) target = $region33
    $region32: #{tpu_custom_call.1} parent=1 // pred_region
      %176 = dma.done [#allocation5], 16
    $region33: #{tpu_custom_call.1} parent=1 // pred_fallthru
      _
    %177 = vsyncpa [#allocation3], 1
    %178 = vsyncpa [#allocation5], 1

</llo_original>
